<compile_context>
chip_gen: v7x
topology: tpu7x:2x2x1
jax: 0.10.0
libtpu: 0.0.40
codegen_flags: <defaults>
</compile_context>

<pallas_src>
import jax
import jax.numpy as jnp
from jax.experimental import pallas as pl
from jax.experimental.pallas import tpu as pltpu

NZ = 100
NZ_PAD = 128           # nz padded to a full lane tile (col NZ carries the bias 1.0)
HIDDEN = 128
NEGATIVE_SLOPE = 0.01
BN_EPS = 1e-5
_VMEM_BUDGET = 24 << 20   # conservative: safe within v7x's 64 MiB physical VMEM


def _round_up(x, m):
    return ((x + m - 1) // m) * m


def _vmem_footprint(tb, tn, out_bytes):
    """Rough double-buffered VMEM footprint estimate (bytes)."""
    return (2 * tb * NZ_PAD * 2          # z tile (bf16)
            + 2 * NZ_PAD * HIDDEN * 2    # w1 (bf16, constant index)
            + 2 * HIDDEN * HIDDEN * 2    # w2 (bf16, constant index)
            + 2 * HIDDEN * 4             # b2 (f32)
            + 2 * HIDDEN * tn * 2        # w3 tile (bf16)
            + 2 * tn * 4                 # b3 tile (f32)
            + 2 * tb * tn * out_bytes    # output tile
            + tb * HIDDEN * 2)           # hidden scratch (bf16)


def generator_kernel(z_ref, w1_ref, w2_ref, b2_ref, w3_ref, b3_ref,
                     o_ref, h_scratch):
    # Grid: (batch tiles, image_size tiles).  With the default full-N tile the
    # second axis has extent 1, so the hidden layers run exactly once per
    # batch tile; the pl.when guard only matters for the tiled-N fallback.
    @pl.when(pl.program_id(1) == 0)
    def _():
        # Layer 1: Linear (BN + bias folded into w1 via the ones column of z)
        # followed by LeakyReLU.  (Dropout = identity in eval mode.)
        h = jnp.dot(z_ref[...], w1_ref[...], preferred_element_type=jnp.float32)
        h = jnp.where(h >= 0.0, h, NEGATIVE_SLOPE * h)
        # Layer 2: Linear (BN folded) + LeakyReLU.
        h = jnp.dot(h.astype(jnp.bfloat16), w2_ref[...],
                    preferred_element_type=jnp.float32)
        h = h + b2_ref[...]
        h = jnp.where(h >= 0.0, h, NEGATIVE_SLOPE * h)
        h_scratch[...] = h.astype(jnp.bfloat16)

    # Layer 3: Linear + Sigmoid on the current output tile.
    out = jnp.dot(h_scratch[...], w3_ref[...], preferred_element_type=jnp.float32)
    out = out + b3_ref[...]
    # sigmoid(x) == 0.5 * tanh(0.5 * x) + 0.5  -> single EUP op, no overflow.
    o_ref[...] = (0.5 * jnp.tanh(0.5 * out) + 0.5).astype(o_ref.dtype)


def prepare_params(params):
    """One-time host-side prep (call once, reuse across forward calls).

    Folds eval-mode BatchNorm into the preceding Linear layers, folds the
    layer-1 bias into the padded weight rows, pads to (8,128)-aligned shapes
    and casts matmul operands to bf16.
    """
    s1 = params["g1"] * jax.lax.rsqrt(params["v1"] + BN_EPS)
    w1 = params["w1"] * s1
    b1 = (params["b1"] - params["m1"]) * s1 + params["be1"]
    s2 = params["g2"] * jax.lax.rsqrt(params["v2"] + BN_EPS)
    w2 = params["w2"] * s2
    b2 = (params["b2"] - params["m2"]) * s2 + params["be2"]

    image_size = params["w3"].shape[1]
    n_pad = _round_up(image_size, 128)

    # Pad nz 100 -> 128; row NZ of w1 carries the folded layer-1 bias and is
    # matched by a 1.0 column in the padded z (bias via the MXU for free).
    w1p = (jnp.zeros((NZ_PAD, HIDDEN), jnp.float32)
           .at[:NZ].set(w1)
           .at[NZ].set(b1[0])
           .astype(jnp.bfloat16))
    w2p = w2.astype(jnp.bfloat16)
    w3p = (jnp.zeros((HIDDEN, n_pad), jnp.float32)
           .at[:, :image_size].set(params["w3"]).astype(jnp.bfloat16))
    b3p = jnp.zeros((1, n_pad), jnp.float32).at[:, :image_size].set(params["b3"])

    return dict(w1p=w1p, w2p=w2p, b2=b2, w3p=w3p, b3p=b3p,
                image_size=image_size, n_pad=n_pad)


def generator_forward(z, prep, *, tb=256, out_dtype=jnp.bfloat16):
    """z: (B, NZ) float32.  prep: output of prepare_params()."""
    B = z.shape[0]
    image_size = prep["image_size"]
    n_pad = prep["n_pad"]
    out_bytes = jnp.dtype(out_dtype).itemsize

    # Batch tiling: multiple of 8; prefer >= 2 tiles so both v7x TensorCores
    # get work (free on v5e/v6e).
    b_pad8 = _round_up(B, 8)
    tb = max(8, _round_up(min(tb, b_pad8), 8))
    if b_pad8 // tb < 2 and b_pad8 >= 16:
        tb = _round_up(b_pad8 // 2, 8)
    b_pad = _round_up(B, tb)

    # Output tiling: full padded image_size (w3/b3 VMEM-resident, effectively
    # 1-D grid) unless the footprint would exceed the cross-generation budget.
    tn = n_pad
    while _vmem_footprint(tb, tn, out_bytes) > _VMEM_BUDGET and tn > 128:
        nxt = tn - 128
        while nxt > 128 and n_pad % nxt != 0:
            nxt -= 128
        tn = nxt

    vmem_limit = int(min(max(_vmem_footprint(tb, tn, out_bytes) + (8 << 20),
                             32 << 20), 56 << 20))

    # Pad z; the extra column NZ is 1.0 so w1p's bias row is applied by the
    # same matmul.  Padded batch rows are sliced off after the call.
    z_p = (jnp.zeros((b_pad, NZ_PAD), jnp.float32)
           .at[:B, :NZ].set(z)
           .at[:, NZ].set(1.0)
           .astype(jnp.bfloat16))

    grid = (b_pad // tb, n_pad // tn)

    out = pl.pallas_call(
        generator_kernel,
        out_shape=jax.ShapeDtypeStruct((b_pad, n_pad), out_dtype),
        grid_spec=pltpu.PrefetchScalarGridSpec(
            num_scalar_prefetch=0,
            grid=grid,
            in_specs=[
                pl.BlockSpec((tb, NZ_PAD), lambda i, j: (i, 0)),       # z (+ ones col)
                pl.BlockSpec((NZ_PAD, HIDDEN), lambda i, j: (0, 0)),   # w1 (BN+bias folded)
                pl.BlockSpec((HIDDEN, HIDDEN), lambda i, j: (0, 0)),   # w2 (BN folded)
                pl.BlockSpec((1, HIDDEN), lambda i, j: (0, 0)),        # b2 (BN folded)
                pl.BlockSpec((HIDDEN, tn), lambda i, j: (0, j)),       # w3
                pl.BlockSpec((1, tn), lambda i, j: (0, j)),            # b3
            ],
            out_specs=pl.BlockSpec((tb, tn), lambda i, j: (i, j)),
            scratch_shapes=[pltpu.VMEM((tb, HIDDEN), jnp.bfloat16)],
        ),
        compiler_params=pltpu.CompilerParams(
            dimension_semantics=("parallel", "arbitrary"),
            vmem_limit_bytes=vmem_limit),
    )(z_p, prep["w1p"], prep["w2p"], prep["b2"], prep["w3p"], prep["b3p"])

    return out[:B, :image_size]


def init_params(key, image_size):
    """Deterministic synthetic parameters matching the torch module's shapes.

    Linear weights are stored as (in_features, out_features) so the kernel can
    use `x @ W`.  BatchNorm params get non-trivial values so the normalization
    path is exercised.
    """
    ks = jax.random.split(key, 14)

    def lin(kw, kb, fan_in, fan_out):
        bound = 1.0 / jnp.sqrt(float(fan_in))
        w = jax.random.uniform(kw, (fan_in, fan_out), jnp.float32, -bound, bound)
        b = jax.random.uniform(kb, (1, fan_out), jnp.float32, -bound, bound)
        return w, b

    w1, b1 = lin(ks[0], ks[1], NZ, HIDDEN)
    w2, b2 = lin(ks[2], ks[3], HIDDEN, HIDDEN)
    w3, b3 = lin(ks[4], ks[5], HIDDEN, image_size)

    def bn(kg, kb, km, kv, n):
        g = 1.0 + 0.1 * jax.random.normal(kg, (1, n), jnp.float32)
        be = 0.1 * jax.random.normal(kb, (1, n), jnp.float32)
        m = 0.05 * jax.random.normal(km, (1, n), jnp.float32)
        v = 1.0 + 0.1 * jax.random.uniform(kv, (1, n), jnp.float32)
        return g, be, m, v

    g1, be1, m1, v1 = bn(ks[6], ks[7], ks[8], ks[9], HIDDEN)
    g2, be2, m2, v2 = bn(ks[10], ks[11], ks[12], ks[13], HIDDEN)

    return dict(
        w1=w1, b1=b1, g1=g1, be1=be1, m1=m1, v1=v1,
        w2=w2, b2=b2, g2=g2, be2=be2, m2=m2, v2=v2,
        w3=w3, b3=b3,
    )


def reference_forward(z, p):
    """Pure-JAX f32 reference (eval-mode torch semantics, no folding)."""
    h = z @ p["w1"] + p["b1"]
    h = (h - p["m1"]) / jnp.sqrt(p["v1"] + BN_EPS) * p["g1"] + p["be1"]
    h = jnp.where(h >= 0, h, NEGATIVE_SLOPE * h)
    h = h @ p["w2"] + p["b2"]
    h = (h - p["m2"]) / jnp.sqrt(p["v2"] + BN_EPS) * p["g2"] + p["be2"]
    h = jnp.where(h >= 0, h, NEGATIVE_SLOPE * h)
    o = h @ p["w3"] + p["b3"]
    return jax.nn.sigmoid(o)


if __name__ == "__main__":
    key = jax.random.PRNGKey(0)
    k_params, k_z = jax.random.split(key)

    batch = 32
    image_size = 192   # padded to 256 lanes inside prepare_params

    params = init_params(k_params, image_size)
    z = jax.random.normal(k_z, (batch, NZ), jnp.float32)

    prep = prepare_params(params)          # one-time BN folding / padding / bf16 casts
    out = generator_forward(z, prep)       # bf16 output, full-N resident w3, 2 batch tiles
    out = jax.block_until_ready(out)

    ref = reference_forward(z, params)
    assert out.shape == (batch, image_size)
    max_err = float(jnp.max(jnp.abs(out.astype(jnp.float32) - ref)))
    assert max_err < 3e-2, max_err         # bf16 matmul + bf16 output tolerance

    print("KERNEL_OK")
</pallas_src>

<mosaic_0001>
module attributes {stable_mosaic.version = 11 : i64} {
  func.func @generator_kernel(%arg0: i32, %arg1: i32, %arg2: memref<16x128xbf16, #tpu.memory_space<vmem>>, %arg3: memref<128x128xbf16, #tpu.memory_space<vmem>>, %arg4: memref<128x128xbf16, #tpu.memory_space<vmem>>, %arg5: memref<1x128xf32, #tpu.memory_space<vmem>>, %arg6: memref<128x256xbf16, #tpu.memory_space<vmem>>, %arg7: memref<1x256xf32, #tpu.memory_space<vmem>>, %arg8: memref<16x256xbf16, #tpu.memory_space<vmem>>, %arg9: memref<16x128xbf16, #tpu.memory_space<vmem>>) attributes {dimension_semantics = [#tpu.dimension_semantics<parallel>, #tpu.dimension_semantics<arbitrary>], iteration_bounds = array<i64: 2, 1>, scalar_prefetch = 0 : i64, scratch_operands = 1 : i64, tpu.core_type = #tpu.core_type<tc>, window_params = [{transform_indices = @transform_0, window_bounds = array<i64: 16, 128>}, {pipeline_mode = #tpu.pipeline_mode<synchronous>, transform_indices = @transform_1, window_bounds = array<i64: 128, 128>}, {pipeline_mode = #tpu.pipeline_mode<synchronous>, transform_indices = @transform_2, window_bounds = array<i64: 128, 128>}, {pipeline_mode = #tpu.pipeline_mode<synchronous>, transform_indices = @transform_3, window_bounds = array<i64: 1, 128>}, {transform_indices = @transform_4, window_bounds = array<i64: 128, 256>}, {transform_indices = @transform_5, window_bounds = array<i64: 1, 256>}, {transform_indices = @transform_6, window_bounds = array<i64: 16, 256>}]} {
    %c0_i32 = arith.constant 0 : i32
    %0 = arith.cmpi eq, %arg1, %c0_i32 : i32
    %1 = arith.extui %0 : i1 to i32
    %c0_i32_0 = arith.constant 0 : i32
    %2 = arith.cmpi ne, %1, %c0_i32_0 : i32
    scf.if %2 {
      %c0_11 = arith.constant 0 : index
      %c0_12 = arith.constant 0 : index
      %18 = vector.load %arg2[%c0_11, %c0_12] : memref<16x128xbf16, #tpu.memory_space<vmem>>, vector<16x128xbf16>
      %c0_13 = arith.constant 0 : index
      %c0_14 = arith.constant 0 : index
      %19 = vector.load %arg3[%c0_13, %c0_14] : memref<128x128xbf16, #tpu.memory_space<vmem>>, vector<128x128xbf16>
      %cst_15 = arith.constant dense<0.000000e+00> : vector<16x128xf32>
      %20 = tpu.matmul %18, %19, %cst_15 {dimension_numbers = #tpu.dot_dimension_numbers<[1], [0], [0], [1], [0, 0, 1, 1], [], []>} : vector<16x128xbf16>, vector<128x128xbf16>, vector<16x128xf32> -> vector<16x128xf32>
      %cst_16 = arith.constant 0.000000e+00 : f32
      %21 = vector.broadcast %cst_16 : f32 to vector<16x128xf32>
      %22 = arith.cmpf oge, %20, %21 : vector<16x128xf32>
      %cst_17 = arith.constant 0.00999999977 : f32
      %23 = vector.broadcast %cst_17 : f32 to vector<16x128xf32>
      %24 = arith.mulf %23, %20 : vector<16x128xf32>
      %25 = arith.select %22, %20, %24 : vector<16x128xi1>, vector<16x128xf32>
      %26 = arith.truncf %25 : vector<16x128xf32> to vector<16x128xbf16>
      %c0_18 = arith.constant 0 : index
      %c0_19 = arith.constant 0 : index
      %27 = vector.load %arg4[%c0_18, %c0_19] : memref<128x128xbf16, #tpu.memory_space<vmem>>, vector<128x128xbf16>
      %cst_20 = arith.constant dense<0.000000e+00> : vector<16x128xf32>
      %28 = tpu.matmul %26, %27, %cst_20 {dimension_numbers = #tpu.dot_dimension_numbers<[1], [0], [0], [1], [0, 0, 1, 1], [], []>} : vector<16x128xbf16>, vector<128x128xbf16>, vector<16x128xf32> -> vector<16x128xf32>
      %c0_21 = arith.constant 0 : index
      %c0_22 = arith.constant 0 : index
      %29 = vector.load %arg5[%c0_21, %c0_22] : memref<1x128xf32, #tpu.memory_space<vmem>>, vector<1x128xf32>
      %30 = vector.broadcast %29 : vector<1x128xf32> to vector<16x128xf32>
      %31 = arith.addf %28, %30 : vector<16x128xf32>
      %cst_23 = arith.constant 0.000000e+00 : f32
      %32 = vector.broadcast %cst_23 : f32 to vector<16x128xf32>
      %33 = arith.cmpf oge, %31, %32 : vector<16x128xf32>
      %cst_24 = arith.constant 0.00999999977 : f32
      %34 = vector.broadcast %cst_24 : f32 to vector<16x128xf32>
      %35 = arith.mulf %34, %31 : vector<16x128xf32>
      %36 = arith.select %33, %31, %35 : vector<16x128xi1>, vector<16x128xf32>
      %37 = arith.truncf %36 : vector<16x128xf32> to vector<16x128xbf16>
      %c0_25 = arith.constant 0 : index
      %c0_26 = arith.constant 0 : index
      %38 = vector.load %arg9[%c0_25, %c0_26] : memref<16x128xbf16, #tpu.memory_space<vmem>>, vector<16x128xbf16>
      tpu.vector_store %arg9[%c0_25, %c0_26], %37 {strides = array<i32>} : memref<16x128xbf16, #tpu.memory_space<vmem>>, vector<16x128xbf16>,
    } else {
    }
    %c0 = arith.constant 0 : index
    %c0_1 = arith.constant 0 : index
    %3 = vector.load %arg9[%c0, %c0_1] : memref<16x128xbf16, #tpu.memory_space<vmem>>, vector<16x128xbf16>
    %c0_2 = arith.constant 0 : index
    %c0_3 = arith.constant 0 : index
    %4 = vector.load %arg6[%c0_2, %c0_3] : memref<128x256xbf16, #tpu.memory_space<vmem>>, vector<128x256xbf16>
    %cst = arith.constant dense<0.000000e+00> : vector<16x256xf32>
    %5 = tpu.matmul %3, %4, %cst {dimension_numbers = #tpu.dot_dimension_numbers<[1], [0], [0], [1], [0, 0, 1, 1], [], []>} : vector<16x128xbf16>, vector<128x256xbf16>, vector<16x256xf32> -> vector<16x256xf32>
    %c0_4 = arith.constant 0 : index
    %c0_5 = arith.constant 0 : index
    %6 = vector.load %arg7[%c0_4, %c0_5] : memref<1x256xf32, #tpu.memory_space<vmem>>, vector<1x256xf32>
    %7 = vector.broadcast %6 : vector<1x256xf32> to vector<16x256xf32>
    %8 = arith.addf %5, %7 : vector<16x256xf32>
    %cst_6 = arith.constant 5.000000e-01 : f32
    %9 = vector.broadcast %cst_6 : f32 to vector<16x256xf32>
    %10 = arith.mulf %9, %8 : vector<16x256xf32>
    %11 = math.tanh %10 : vector<16x256xf32>
    %cst_7 = arith.constant 5.000000e-01 : f32
    %12 = vector.broadcast %cst_7 : f32 to vector<16x256xf32>
    %13 = arith.mulf %12, %11 : vector<16x256xf32>
    %cst_8 = arith.constant 5.000000e-01 : f32
    %14 = vector.broadcast %cst_8 : f32 to vector<16x256xf32>
    %15 = arith.addf %13, %14 : vector<16x256xf32>
    %16 = arith.truncf %15 : vector<16x256xf32> to vector<16x256xbf16>
    %c0_9 = arith.constant 0 : index
    %c0_10 = arith.constant 0 : index
    %17 = vector.load %arg8[%c0_9, %c0_10] : memref<16x256xbf16, #tpu.memory_space<vmem>>, vector<16x256xbf16>
    tpu.vector_store %arg8[%c0_9, %c0_10], %16 {strides = array<i32>} : memref<16x256xbf16, #tpu.memory_space<vmem>>, vector<16x256xbf16>,
    return
  }
  func.func @transform_0(%arg0: i32, %arg1: i32) -> (i32, i32) {
    %c0_i32 = arith.constant 0 : i32
    %c0_i32_0 = arith.constant 0 : i32
    return %arg0, %c0_i32 : i32, i32
  }
  func.func @transform_1(%arg0: i32, %arg1: i32) -> (i32, i32) {
    %c0_i32 = arith.constant 0 : i32
    %c0_i32_0 = arith.constant 0 : i32
    %c0_i32_1 = arith.constant 0 : i32
    return %c0_i32, %c0_i32_0 : i32, i32
  }
  func.func @transform_2(%arg0: i32, %arg1: i32) -> (i32, i32) {
    %c0_i32 = arith.constant 0 : i32
    %c0_i32_0 = arith.constant 0 : i32
    %c0_i32_1 = arith.constant 0 : i32
    return %c0_i32, %c0_i32_0 : i32, i32
  }
  func.func @transform_3(%arg0: i32, %arg1: i32) -> (i32, i32) {
    %c0_i32 = arith.constant 0 : i32
    %c0_i32_0 = arith.constant 0 : i32
    %c0_i32_1 = arith.constant 0 : i32
    return %c0_i32, %c0_i32_0 : i32, i32
  }
  func.func @transform_4(%arg0: i32, %arg1: i32) -> (i32, i32) {
    %c0_i32 = arith.constant 0 : i32
    %c0_i32_0 = arith.constant 0 : i32
    return %c0_i32, %arg1 : i32, i32
  }
  func.func @transform_5(%arg0: i32, %arg1: i32) -> (i32, i32) {
    %c0_i32 = arith.constant 0 : i32
    %c0_i32_0 = arith.constant 0 : i32
    return %c0_i32, %arg1 : i32, i32
  }
  func.func @transform_6(%arg0: i32, %arg1: i32) -> (i32, i32) {
    %c0_i32 = arith.constant 0 : i32
    return %arg0, %arg1 : i32, i32
  }
}

</mosaic_0001>

<llo_original>
// kernel: tpu_custom_call.1
$region0: #{tpu_custom_call.1}
  #allocation0 [shape = 'u32[]', space=smem, size = 0x4, offset = 0x4, fixed_abs, tag = 'smem constant byte address 0x4 - core index']
  #allocation1 [shape = 'u32[144,128]{1,0:T(1,128)}', space=vmem, size = 0x12000, scoped, tag = 'internal scratch']
  #allocation2 [shape = 'bf16[16,128]{1,0:T(16,128)(2,1)}', space=vmem, size = 0x1000, scoped, tag = 'scratch operand']
  %s0 = inlined_call_operand.hbm [shape: bf16[32,128], index: 0, kind: input, shape index: {}]
  %s1 = inlined_call_operand.hbm [shape: bf16[128,128], index: 1, kind: input, shape index: {}]
  %s2 = inlined_call_operand.hbm [shape: bf16[128,128], index: 2, kind: input, shape index: {}]
  %s3 = inlined_call_operand.vmem [shape: f32[1,128], index: 3, kind: input, shape index: {}]
  %s4 = inlined_call_operand.hbm [shape: bf16[128,256], index: 4, kind: input, shape index: {}]
  %s5 = inlined_call_operand.vmem [shape: f32[1,256], index: 5, kind: input, shape index: {}]
  %s6 = inlined_call_operand.hbm [shape: bf16[32,256], index: 6, kind: output, shape index: {}]
  %s7 = sld [smem:[#allocation0]]
  $region77: #{tpu_custom_call.1} parent=0
    _
  %s9 = ssub.s32 1, %s7
  %s10 = scalar_select 0, %s9, %s7
  $region1: #{tpu_custom_call.1} parent=0
    #allocation3 [shape = 'u8[8192]{0}', space=vmem, size = 0x2000, scoped, tag = 'input window, operand 0']
    #allocation4 [shape = 's32[2]{0}', space=sflag, size = 0x8, scoped, tag = 'scoped memory for tpu_custom_call.1']
    #allocation5 [shape = 's32[2]{0}', space=sflag, size = 0x8, scoped, tag = 'scoped memory for tpu_custom_call.1']
    #allocation6 [shape = 'u8[32768]{0}', space=vmem, size = 0x8000, scoped, tag = 'input window, operand 1, single buffered']
    #allocation7 [shape = 's32[1]{0}', space=sflag, size = 0x4, scoped, tag = 'scoped memory for tpu_custom_call.1']
    #allocation8 [shape = 'u8[32768]{0}', space=vmem, size = 0x8000, scoped, tag = 'input window, operand 2, single buffered']
    #allocation9 [shape = 'u8[65536]{0}', space=vmem, size = 0x10000, scoped, tag = 'input window, operand 4, single buffered']
    #allocation10 [shape = 's32[1]{0}', space=sflag, size = 0x4, scoped, tag = 'scoped memory for tpu_custom_call.1']
    #allocation11 [shape = 'u8[16384]{0}', space=vmem, size = 0x4000, scoped, tag = 'output window, operand 0']
    %11 = vsyncpa [#allocation4], 0
    %s12 = scalar_lea.sflag [#allocation4], 1
    %13 = vsyncpa %s12, 0
    %14 = vsyncpa [#allocation7], 0
    %15 = vsyncpa [#allocation10], 0
    %16 = vsyncpa [#allocation5], 0
    %s17 = scalar_lea.sflag [#allocation5], 1
    %18 = vsyncpa %s17, 0
    loop: start=0, step=1, limit=4
    $region2: #{tpu_custom_call.1} parent=1 // loop_pre_header
      _
    $region3: #{tpu_custom_call.1} parent=1 // loop_header
      %s20 = sphi 0, %s24
      %p21 = scmp.ge.s32.totalorder %s20, 4
      %s27 = sphi 0, %s39
      %s28 = sphi 0, %s35
      %s29 = sphi 0, %s27
      %s30 = sphi 0, %s28
      %s31 = sphi 0, %s29
      %s32 = sphi 0, %s30
      %s42 = sphi 0, %s44
      %s45 = sphi 0, %s42
      %s46 = sphi 0, %s45
      %s62 = sphi 0, %s46
      %s66 = sphi 0, %s66
      %s68 = sphi 0, %s66
      %s69 = sphi 0, %s68
      %s83 = sphi 0, %s69
      %s87 = sphi 0, %s87
      %s89 = sphi 0, %s87
      %s90 = sphi 0, %s89
      %s104 = sphi 0, %s90
      %s108 = sphi 0, %s108
      %s110 = sphi 0, %s108
      %s111 = sphi 0, %s110
      %s125 = sphi 0, %s111
      %s131 = sphi 0, %s133
      %s134 = sphi 0, %s131
      %s135 = sphi 0, %s134
      %s151 = sphi 0, %s135
      %s157 = sphi 0, %s159
      %s160 = sphi 0, %s157
      %s161 = sphi 0, %s160
      %s177 = sphi 0, %s161
      %s185 = sphi 0, %s187
      %s188 = sphi 0, %s185
      %s189 = sphi 0, %s188
      %s205 = sphi 0, %s189
    $region4: #{tpu_custom_call.1} parent=1 // loop_header_branch
      %23 = sbr.rel (%p21) target = $region8
    $region5: #{tpu_custom_call.1} parent=1 // loop_body
      %s25 = ssub.s32 %s20, 1
      %s26 = ssub.s32 %s20, 2
      %s33 = sadd.s32 1, %s28
      %p34 = scmp.ge.s32.totalorder %s33, 1
      %s35 = scalar_select %p34, 0, %s33
      %s36 = sadd.s32 1, %s27
      %s37 = scalar_select %p34, %s36, %s27
      %p38 = scmp.ge.s32.totalorder %s37, 2
      %s39 = scalar_select %p38, 0, %s37
      %s40 = ssub.s32 %s27, %s39
      %p41 = scmp.eq.s32.totalorder %s40, 0
      %s43 = sadd.s32 %s42, 1
      %s44 = scalar_select %p41, %s42, %s43
      %p47 = pneg %p41
      %p48 = scmp.eq.s32.totalorder %s20, 1
      %p49 = por %p47, %p48
      %p50 = scmp.ne.s32.totalorder %s42, %s45
      %p51 = scmp.eq.s32.totalorder %s20, 0
      %p52 = por %p50, %p51
      %p53 = scmp.ne.s32.totalorder %s42, %s45
      %p54 = scmp.eq.s32.totalorder %s25, 1
      %p55 = por %p53, %p54
      %p56 = scmp.ne.s32.totalorder %s45, %s46
      %p57 = scmp.eq.s32.totalorder %s25, 0
      %p58 = por %p56, %p57
      %p59 = scmp.ne.s32.totalorder %s45, %s46
      %p60 = scmp.eq.s32.totalorder %s26, 1
      %p61 = por %p59, %p60
      %p63 = scmp.ne.s32.totalorder %s46, %s62
      %p64 = scmp.eq.s32.totalorder %s26, 0
      %p65 = por %p63, %p64
      %s67 = sadd.s32 %s66, 1
      %p70 = scmp.eq.s32.totalorder %s20, 1
      %p71 = scmp.ne.s32.totalorder %s66, %s68
      %p72 = scmp.eq.s32.totalorder %s20, 0
      %p73 = por %p71, %p72
      %p74 = scmp.ne.s32.totalorder %s66, %s68
      %p75 = scmp.eq.s32.totalorder %s25, 1
      %p76 = por %p74, %p75
      %p77 = scmp.ne.s32.totalorder %s68, %s69
      %p78 = scmp.eq.s32.totalorder %s25, 0
      %p79 = por %p77, %p78
      %p80 = scmp.ne.s32.totalorder %s68, %s69
      %p81 = scmp.eq.s32.totalorder %s26, 1
      %p82 = por %p80, %p81
      %p84 = scmp.ne.s32.totalorder %s69, %s83
      %p85 = scmp.eq.s32.totalorder %s26, 0
      %p86 = por %p84, %p85
      %s88 = sadd.s32 %s87, 1
      %p91 = scmp.eq.s32.totalorder %s20, 1
      %p92 = scmp.ne.s32.totalorder %s87, %s89
      %p93 = scmp.eq.s32.totalorder %s20, 0
      %p94 = por %p92, %p93
      %p95 = scmp.ne.s32.totalorder %s87, %s89
      %p96 = scmp.eq.s32.totalorder %s25, 1
      %p97 = por %p95, %p96
      %p98 = scmp.ne.s32.totalorder %s89, %s90
      %p99 = scmp.eq.s32.totalorder %s25, 0
      %p100 = por %p98, %p99
      %p101 = scmp.ne.s32.totalorder %s89, %s90
      %p102 = scmp.eq.s32.totalorder %s26, 1
      %p103 = por %p101, %p102
      %p105 = scmp.ne.s32.totalorder %s90, %s104
      %p106 = scmp.eq.s32.totalorder %s26, 0
      %p107 = por %p105, %p106
      %s109 = sadd.s32 %s108, 1
      %p112 = scmp.eq.s32.totalorder %s20, 1
      %p113 = scmp.ne.s32.totalorder %s108, %s110
      %p114 = scmp.eq.s32.totalorder %s20, 0
      %p115 = por %p113, %p114
      %p116 = scmp.ne.s32.totalorder %s108, %s110
      %p117 = scmp.eq.s32.totalorder %s25, 1
      %p118 = por %p116, %p117
      %p119 = scmp.ne.s32.totalorder %s110, %s111
      %p120 = scmp.eq.s32.totalorder %s25, 0
      %p121 = por %p119, %p120
      %p122 = scmp.ne.s32.totalorder %s110, %s111
      %p123 = scmp.eq.s32.totalorder %s26, 1
      %p124 = por %p122, %p123
      %p126 = scmp.ne.s32.totalorder %s111, %s125
      %p127 = scmp.eq.s32.totalorder %s26, 0
      %p128 = por %p126, %p127
      %s129 = ssub.s32 %s28, %s35
      %p130 = scmp.eq.s32.totalorder %s129, 0
      %s132 = sadd.s32 %s131, 1
      %s133 = scalar_select %p130, %s131, %s132
      %p136 = pneg %p130
      %p137 = scmp.eq.s32.totalorder %s20, 1
      %p138 = por %p136, %p137
      %p139 = scmp.ne.s32.totalorder %s131, %s134
      %p140 = scmp.eq.s32.totalorder %s20, 0
      %p141 = por %p139, %p140
      %p142 = scmp.ne.s32.totalorder %s131, %s134
      %p143 = scmp.eq.s32.totalorder %s25, 1
      %p144 = por %p142, %p143
      %p145 = scmp.ne.s32.totalorder %s134, %s135
      %p146 = scmp.eq.s32.totalorder %s25, 0
      %p147 = por %p145, %p146
      %p148 = scmp.ne.s32.totalorder %s134, %s135
      %p149 = scmp.eq.s32.totalorder %s26, 1
      %p150 = por %p148, %p149
      %p152 = scmp.ne.s32.totalorder %s135, %s151
      %p153 = scmp.eq.s32.totalorder %s26, 0
      %p154 = por %p152, %p153
      %s155 = ssub.s32 %s28, %s35
      %p156 = scmp.eq.s32.totalorder %s155, 0
      %s158 = sadd.s32 %s157, 1
      %s159 = scalar_select %p156, %s157, %s158
      %p162 = pneg %p156
      %p163 = scmp.eq.s32.totalorder %s20, 1
      %p164 = por %p162, %p163
      %p165 = scmp.ne.s32.totalorder %s157, %s160
      %p166 = scmp.eq.s32.totalorder %s20, 0
      %p167 = por %p165, %p166
      %p168 = scmp.ne.s32.totalorder %s157, %s160
      %p169 = scmp.eq.s32.totalorder %s25, 1
      %p170 = por %p168, %p169
      %p171 = scmp.ne.s32.totalorder %s160, %s161
      %p172 = scmp.eq.s32.totalorder %s25, 0
      %p173 = por %p171, %p172
      %p174 = scmp.ne.s32.totalorder %s160, %s161
      %p175 = scmp.eq.s32.totalorder %s26, 1
      %p176 = por %p174, %p175
      %p178 = scmp.ne.s32.totalorder %s161, %s177
      %p179 = scmp.eq.s32.totalorder %s26, 0
      %p180 = por %p178, %p179
      %s181 = ssub.s32 %s27, %s39
      %s182 = ssub.s32 %s28, %s35
      %s183 = sor.u32 %s181, %s182
      %p184 = scmp.eq.s32.totalorder %s183, 0
      %s186 = sadd.s32 %s185, 1
      %s187 = scalar_select %p184, %s185, %s186
      %p190 = pneg %p184
      %p191 = scmp.eq.s32.totalorder %s20, 1
      %p192 = por %p190, %p191
      %p193 = scmp.ne.s32.totalorder %s185, %s188
      %p194 = scmp.eq.s32.totalorder %s20, 0
      %p195 = por %p193, %p194
      %p196 = scmp.ne.s32.totalorder %s185, %s188
      %p197 = scmp.eq.s32.totalorder %s25, 1
      %p198 = por %p196, %p197
      %p199 = scmp.ne.s32.totalorder %s188, %s189
      %p200 = scmp.eq.s32.totalorder %s25, 0
      %p201 = por %p199, %p200
      %p202 = scmp.ne.s32.totalorder %s188, %s189
      %p203 = scmp.eq.s32.totalorder %s26, 1
      %p204 = por %p202, %p203
      %p206 = scmp.ne.s32.totalorder %s189, %s205
      %p207 = scmp.eq.s32.totalorder %s26, 0
      %p208 = por %p206, %p207
      %p209 = scmp.le.s32.totalorder 1, %s20
      %p210 = scmp.lt.s32.totalorder %s20, 3
      %p211 = pnand %p209, %p210
      %p212 = pneg %p211
      // Predicated region
      $region9: #{tpu_custom_call.1} parent=5 // pred_check
        _
      $region10: #{tpu_custom_call.1} parent=5 // pred_check_branch
        %214 = sbr.rel (%p211) target = $region12
      $region11: #{tpu_custom_call.1} parent=5 // pred_region
        %s215 = ssub.s32 %s20, 1
        // Predicated region
        $region13: #{tpu_custom_call.1} parent=11 // pred_check
          %p216 = pneg %p79
        $region14: #{tpu_custom_call.1} parent=11 // pred_check_branch
          %218 = sbr.rel (%p216) target = $region16
        $region15: #{tpu_custom_call.1} parent=11 // pred_region
          %s220 = ssub.s32 1024, 1024
          %221 = vsyncadd [#allocation7], %s220
          %s222 = sshll.u32 [#allocation6], 4
          %s223 = int_to_ptr.vmem [resolvable:$true] %s222
          %228 = dma.hbm_to_vmem [thread:$0]  %s1, 1024, %s223, [#allocation7], 64, 64, 4
        $region16: #{tpu_custom_call.1} parent=11 // pred_fallthru
          _
        // Predicated region
        $region17: #{tpu_custom_call.1} parent=11 // pred_check
          %p229 = pneg %p100
        $region18: #{tpu_custom_call.1} parent=11 // pred_check_branch
          %231 = sbr.rel (%p229) target = $region20
        $region19: #{tpu_custom_call.1} parent=11 // pred_region
          %s233 = ssub.s32 1024, 1024
          %234 = vsyncadd [#allocation7], %s233
          %s235 = sshll.u32 [#allocation8], 4
          %s236 = int_to_ptr.vmem [resolvable:$true] %s235
          %241 = dma.hbm_to_vmem [thread:$0]  %s2, 1024, %s236, [#allocation7], 64, 64, 4
        $region20: #{tpu_custom_call.1} parent=11 // pred_fallthru
          _
        // Predicated region
        $region21: #{tpu_custom_call.1} parent=11 // pred_check
          %p242 = pneg %p121
        $region22: #{tpu_custom_call.1} parent=11 // pred_check_branch
          %244 = sbr.rel (%p242) target = $region24
        $region23: #{tpu_custom_call.1} parent=11 // pred_region
          _
        $region24: #{tpu_custom_call.1} parent=11 // pred_fallthru
          _
        // Predicated region
        $region25: #{tpu_custom_call.1} parent=11 // pred_check
          %p245 = pneg %p147
        $region26: #{tpu_custom_call.1} parent=11 // pred_check_branch
          %247 = sbr.rel (%p245) target = $region28
        $region27: #{tpu_custom_call.1} parent=11 // pred_region
          %s248 = smul.u32 2, %s30
          %s250 = ssub.s32 2048, 2048
          %251 = vsyncadd [#allocation10], %s250
          %s252 = smul.addr %s248, 64
          %s253 = scalar_lea.hbm %s4, %s252
          %s254 = sshll.u32 [#allocation9], 4
          %s255 = int_to_ptr.vmem [resolvable:$true] %s254
          %260 = dma.hbm_to_vmem [thread:$0]  %s253, 2048, %s255, [#allocation10], 128, 128, 8
        $region28: #{tpu_custom_call.1} parent=11 // pred_fallthru
          _
        // Predicated region
        $region29: #{tpu_custom_call.1} parent=11 // pred_check
          %p261 = pneg %p173
        $region30: #{tpu_custom_call.1} parent=11 // pred_check_branch
          %263 = sbr.rel (%p261) target = $region32
        $region31: #{tpu_custom_call.1} parent=11 // pred_region
          %s264 = smul.u32 2, %s30
          %p265 = scmp.lt.s32.totalorder %s264, 1
          %s266 = scalar_select %p265, %s264, 1
          %s267 = scalar_lea.vmem %s5, %s266
          %s268 = smul.u32 2, %s30
        $region32: #{tpu_custom_call.1} parent=11 // pred_fallthru
          _
      $region12: #{tpu_custom_call.1} parent=5 // pred_fallthru
        _
      %p269 = scmp.lt.s32.totalorder %s20, 2
      // Predicated region
      $region33: #{tpu_custom_call.1} parent=5 // pred_check
        %p270 = pneg %p269
      $region34: #{tpu_custom_call.1} parent=5 // pred_check_branch
        %272 = sbr.rel (%p270) target = $region36
      $region35: #{tpu_custom_call.1} parent=5 // pred_region
        // Predicated region
        $region37: #{tpu_custom_call.1} parent=35 // pred_check
          %p273 = pneg %p52
        $region38: #{tpu_custom_call.1} parent=35 // pred_check_branch
          %275 = sbr.rel (%p273) target = $region40
        $region39: #{tpu_custom_call.1} parent=35 // pred_region
          %s276 = sand.u32 %s42, 1
          %s277 = scalar_lea.sflag [#allocation4], %s276
          %s278 = sand.u32 %s42, 1
          %s279 = smul.addr %s278, 8
          %s280 = scalar_lea.vmem [#allocation3], %s279
          %s281 = smul.u32 2, %s27
          %s283 = ssub.s32 128, 128
          %284 = vsyncadd %s277, %s283
          %s285 = smul.addr %s281, 64
          %s286 = scalar_lea.hbm %s0, %s285
          %s287 = sshll.u32 %s280, 4
          %s288 = int_to_ptr.vmem [resolvable:$true] %s287
          %293 = dma.hbm_to_vmem [thread:$0]  %s286, 128, %s288, %s277, 64, 64, 4
        $region40: #{tpu_custom_call.1} parent=35 // pred_fallthru
          _
      $region36: #{tpu_custom_call.1} parent=5 // pred_fallthru
        _
      %p294 = scmp.le.s32.totalorder 1, %s20
      %p295 = scmp.lt.s32.totalorder %s20, 3
      %p296 = pnand %p294, %p295
      %p297 = pneg %p296
      // Predicated region
      $region41: #{tpu_custom_call.1} parent=5 // pred_check
        _
      $region42: #{tpu_custom_call.1} parent=5 // pred_check_branch
        %299 = sbr.rel (%p296) target = $region44
      $region43: #{tpu_custom_call.1} parent=5 // pred_region
        %s300 = ssub.s32 %s20, 1
        %s301 = sand.u32 %s45, 1
        %s302 = scalar_lea.sflag [#allocation4], %s301
        %s303 = sand.u32 %s45, 1
        %s304 = smul.addr %s303, 8
        %s305 = scalar_lea.vmem [#allocation3], %s304
        // Predicated region
        $region45: #{tpu_custom_call.1} parent=43 // pred_check
          %p306 = pneg %p58
        $region46: #{tpu_custom_call.1} parent=43 // pred_check_branch
          %308 = sbr.rel (%p306) target = $region48
        $region47: #{tpu_custom_call.1} parent=43 // pred_region
          %309 = dma.done %s302, 128
        $region48: #{tpu_custom_call.1} parent=43 // pred_fallthru
          _
        // Predicated region
        $region49: #{tpu_custom_call.1} parent=43 // pred_check
          %p310 = pneg %p79
        $region50: #{tpu_custom_call.1} parent=43 // pred_check_branch
          %312 = sbr.rel (%p310) target = $region52
        $region51: #{tpu_custom_call.1} parent=43 // pred_region
          %313 = dma.done [#allocation7], 1024
        $region52: #{tpu_custom_call.1} parent=43 // pred_fallthru
          _
        // Predicated region
        $region53: #{tpu_custom_call.1} parent=43 // pred_check
          %p314 = pneg %p100
        $region54: #{tpu_custom_call.1} parent=43 // pred_check_branch
          %316 = sbr.rel (%p314) target = $region56
        $region55: #{tpu_custom_call.1} parent=43 // pred_region
          %317 = dma.done [#allocation7], 1024
        $region56: #{tpu_custom_call.1} parent=43 // pred_fallthru
          _
        // Predicated region
        $region57: #{tpu_custom_call.1} parent=43 // pred_check
          %p318 = pneg %p147
        $region58: #{tpu_custom_call.1} parent=43 // pred_check_branch
          %320 = sbr.rel (%p318) target = $region60
        $region59: #{tpu_custom_call.1} parent=43 // pred_region
          %321 = dma.done [#allocation10], 2048
        $region60: #{tpu_custom_call.1} parent=43 // pred_fallthru
          _
        %s322 = sand.u32 %s45, 1
        %s323 = scalar_lea.sflag [#allocation4], %s322
        %s324 = sand.u32 %s45, 1
        %s325 = smul.addr %s324, 8
        %s326 = scalar_lea.vmem [#allocation3], %s325
        %p327 = pneg %p58
        %p328 = pneg %p55
        %p329 = pneg %p79
        %p330 = pneg %p76
        %p331 = pneg %p100
        %p332 = pneg %p97
        %p333 = pneg %p121
        %p334 = pneg %p118
        %p335 = pneg %p147
        %p336 = pneg %p144
        %s337 = smul.u32 2, %s30
        %p338 = scmp.lt.s32.totalorder %s337, 1
        %s339 = scalar_select %p338, %s337, 1
        %s340 = scalar_lea.vmem %s5, %s339
        %p341 = pneg %p173
        %p342 = pneg %p170
        %p343 = pneg %p201
        %p344 = pneg %p198
        %s345 = sand.u32 %s188, 1
        %s346 = scalar_lea.sflag [#allocation5], %s345
        %s347 = sand.u32 %s188, 1
        %s348 = smul.addr %s347, 16
        %s349 = scalar_lea.vmem [#allocation11], %s348
        %s350 = smul.u32 2, %s29
        %s351 = smul.u32 2, %s30
        %s352 = smul.u32 2, %s30
        %p353 = scmp.lt.s32.totalorder %s352, 1
        %s354 = scalar_select %p353, %s352, 1
        %s355 = scalar_lea.vmem %s5, %s354
        %s356 = smul.u32 2, %s30
        %s357 = smul.u32 2, %s29
        %s358 = smul.u32 2, %s30
        %p360 = scmp.eq.s32.totalorder %s30, 0
        // Predicated region
        $region61: #{tpu_custom_call.1} parent=43 // pred_check
          %p361 = pneg %p360
        $region62: #{tpu_custom_call.1} parent=43 // pred_check_branch
          %363 = sbr.rel (%p361) target = $region64
        $region63: #{tpu_custom_call.1} parent=43 // pred_region
          %v364 = vld [vmem:[%s305] sm:$0xf]
          %v365 = vld [vmem:[%s305 + $0x4] sm:$0xf]
          %v366 = vld [vmem:[#allocation6] sm:$0xf]
          %v367 = vld [vmem:[#allocation6 + $0x4] sm:$0xf]
          %v368 = vld [vmem:[#allocation6 + $0x8] sm:$0xf]
          %v369 = vld [vmem:[#allocation6 + $0xc] sm:$0xf]
          %v370 = vld [vmem:[#allocation6 + $0x10] sm:$0xf]
          %v371 = vld [vmem:[#allocation6 + $0x14] sm:$0xf]
          %v372 = vld [vmem:[#allocation6 + $0x18] sm:$0xf]
          %v373 = vld [vmem:[#allocation6 + $0x1c] sm:$0xf]
          %v374 = vld [vmem:[#allocation6 + $0x20] sm:$0xf]
          %v375 = vld [vmem:[#allocation6 + $0x24] sm:$0xf]
          %v376 = vld [vmem:[#allocation6 + $0x28] sm:$0xf]
          %v377 = vld [vmem:[#allocation6 + $0x2c] sm:$0xf]
          %v378 = vld [vmem:[#allocation6 + $0x30] sm:$0xf]
          %v379 = vld [vmem:[#allocation6 + $0x34] sm:$0xf]
          %v380 = vld [vmem:[#allocation6 + $0x38] sm:$0xf]
          %v381 = vld [vmem:[#allocation6 + $0x3c] sm:$0xf]
          %v384 = vunpack.c.l.b16 %v364
          %v385 = vunpack.c.l.b16 %v365
          %v386 = vpack.c.b16 %v385, %v384
          %v404 = vunpack.c.l.b16 %v366
          %v405 = vunpack.c.l.b16 %v367
          %v406 = vunpack.c.l.b16 %v368
          %v407 = vunpack.c.l.b16 %v369
          %v408 = vunpack.c.l.b16 %v370
          %v409 = vunpack.c.l.b16 %v371
          %v410 = vunpack.c.l.b16 %v372
          %v411 = vunpack.c.l.b16 %v373
          %v412 = vunpack.c.l.b16 %v374
          %v413 = vunpack.c.l.b16 %v375
          %v414 = vunpack.c.l.b16 %v376
          %v415 = vunpack.c.l.b16 %v377
          %v416 = vunpack.c.l.b16 %v378
          %v417 = vunpack.c.l.b16 %v379
          %v418 = vunpack.c.l.b16 %v380
          %v419 = vunpack.c.l.b16 %v381
          %v420 = vpack.c.b16 %v405, %v404
          %v421 = vpack.c.b16 %v407, %v406
          %v422 = vpack.c.b16 %v409, %v408
          %v423 = vpack.c.b16 %v411, %v410
          %v424 = vpack.c.b16 %v413, %v412
          %v425 = vpack.c.b16 %v415, %v414
          %v426 = vpack.c.b16 %v417, %v416
          %v427 = vpack.c.b16 %v419, %v418
          %436 = vmatprep.subr.bf16.mxu0 0
          %437 = vmatpush1.bf16.msra.mxu0 %v420
          %438 = vmatprep.subr.bf16.mxu0 0
          %439 = vmatpush1.bf16.msra.mxu0 %v421
          %440 = vmatprep.subr.bf16.mxu0 0
          %441 = vmatpush1.bf16.msra.mxu0 %v422
          %442 = vmatprep.subr.bf16.mxu0 0
          %443 = vmatpush1.bf16.msra.mxu0 %v423
          %444 = vmatprep.subr.bf16.mxu0 0
          %445 = vmatpush1.bf16.msra.mxu0 %v424
          %446 = vmatprep.subr.bf16.mxu0 0
          %447 = vmatpush1.bf16.msra.mxu0 %v425
          %448 = vmatprep.subr.bf16.mxu0 0
          %449 = vmatpush1.bf16.msra.mxu0 %v426
          %450 = vmatprep.subr.bf16.mxu0 0
          %451 = vmatpush1.bf16.msra.mxu0 %v427
          %452 = vmatprep.subr.bf16.mxu0 0
          %453 = vmatpush1.bf16.msra.mxu0 0
          %454 = vmatprep.subr.bf16.mxu0 0
          %455 = vmatpush1.bf16.msra.mxu0 0
          %456 = vmatprep.subr.bf16.mxu0 0
          %457 = vmatpush1.bf16.msra.mxu0 0
          %458 = vmatprep.subr.bf16.mxu0 0
          %459 = vmatpush1.bf16.msra.mxu0 0
          %460 = vmatprep.subr.bf16.mxu0 0
          %461 = vmatpush1.bf16.msra.mxu0 0
          %462 = vmatprep.subr.bf16.mxu0 0
          %463 = vmatpush1.bf16.msra.mxu0 0
          %464 = vmatprep.subr.bf16.mxu0 0
          %465 = vmatpush1.bf16.msra.mxu0 0
          %466 = vmatprep.subr.bf16.mxu0 0
          %467 = vmatpush1.bf16.msra.mxu0 0
          %468 = vmatprep.mubr.bf16.mxu0 0
          %469 = vmatmul.mubr.bf16.gmra.mrb[0].mxu0 %v386
          %v470 = vpop.f32.mrb[0].mxu0
          %v471 = vadd.f32 0.0, %v470
          %v472 = vpop.f32.mrb[0].mxu0
          %v473 = vpop.f32.mrb[0].mxu0
          %v474 = vadd.f32 0.0, %v473
          %v475 = vpop.f32.mrb[0].mxu0
          %476 = vdwg.mxu0
          %vm477 = vcmp.ge.f32.partialorder %v471, 0.0
          %vm478 = vcmp.ge.f32.partialorder %v474, 0.0
          %v479 = vmul.f32 %v471, 0.01
          %v480 = vmul.f32 %v474, 0.01
          %v481 = vsel %vm477, %v471, %v479
          %v482 = vsel %vm478, %v474, %v480
          %v483 = vpack.c.bf16 %v482, %v481
          %v484 = vld [vmem:[#allocation8] sm:$0xf]
          %v485 = vld [vmem:[#allocation8 + $0x4] sm:$0xf]
          %v486 = vld [vmem:[#allocation8 + $0x8] sm:$0xf]
          %v487 = vld [vmem:[#allocation8 + $0xc] sm:$0xf]
          %v488 = vld [vmem:[#allocation8 + $0x10] sm:$0xf]
          %v489 = vld [vmem:[#allocation8 + $0x14] sm:$0xf]
          %v490 = vld [vmem:[#allocation8 + $0x18] sm:$0xf]
          %v491 = vld [vmem:[#allocation8 + $0x1c] sm:$0xf]
          %v492 = vld [vmem:[#allocation8 + $0x20] sm:$0xf]
          %v493 = vld [vmem:[#allocation8 + $0x24] sm:$0xf]
          %v494 = vld [vmem:[#allocation8 + $0x28] sm:$0xf]
          %v495 = vld [vmem:[#allocation8 + $0x2c] sm:$0xf]
          %v496 = vld [vmem:[#allocation8 + $0x30] sm:$0xf]
          %v497 = vld [vmem:[#allocation8 + $0x34] sm:$0xf]
          %v498 = vld [vmem:[#allocation8 + $0x38] sm:$0xf]
          %v499 = vld [vmem:[#allocation8 + $0x3c] sm:$0xf]
          %v500 = vld [vmem:[%s3] sm:$0x1]
          %v502 = vlaneseq
          %v503 = vshrl.u32 %v502, 7
          %v504 = vsub.s32 0, %v503
          %v505 = vrot.slane %v500, %v504
          %v523 = vunpack.c.l.b16 %v484
          %v524 = vunpack.c.l.b16 %v485
          %v525 = vunpack.c.l.b16 %v486
          %v526 = vunpack.c.l.b16 %v487
          %v527 = vunpack.c.l.b16 %v488
          %v528 = vunpack.c.l.b16 %v489
          %v529 = vunpack.c.l.b16 %v490
          %v530 = vunpack.c.l.b16 %v491
          %v531 = vunpack.c.l.b16 %v492
          %v532 = vunpack.c.l.b16 %v493
          %v533 = vunpack.c.l.b16 %v494
          %v534 = vunpack.c.l.b16 %v495
          %v535 = vunpack.c.l.b16 %v496
          %v536 = vunpack.c.l.b16 %v497
          %v537 = vunpack.c.l.b16 %v498
          %v538 = vunpack.c.l.b16 %v499
          %v539 = vpack.c.b16 %v524, %v523
          %v540 = vpack.c.b16 %v526, %v525
          %v541 = vpack.c.b16 %v528, %v527
          %v542 = vpack.c.b16 %v530, %v529
          %v543 = vpack.c.b16 %v532, %v531
          %v544 = vpack.c.b16 %v534, %v533
          %v545 = vpack.c.b16 %v536, %v535
          %v546 = vpack.c.b16 %v538, %v537
          %555 = vmatprep.subr.bf16.mxu0 0
          %556 = vmatpush1.bf16.msra.mxu0 %v539
          %557 = vmatprep.subr.bf16.mxu0 0
          %558 = vmatpush1.bf16.msra.mxu0 %v540
          %559 = vmatprep.subr.bf16.mxu0 0
          %560 = vmatpush1.bf16.msra.mxu0 %v541
          %561 = vmatprep.subr.bf16.mxu0 0
          %562 = vmatpush1.bf16.msra.mxu0 %v542
          %563 = vmatprep.subr.bf16.mxu0 0
          %564 = vmatpush1.bf16.msra.mxu0 %v543
          %565 = vmatprep.subr.bf16.mxu0 0
          %566 = vmatpush1.bf16.msra.mxu0 %v544
          %567 = vmatprep.subr.bf16.mxu0 0
          %568 = vmatpush1.bf16.msra.mxu0 %v545
          %569 = vmatprep.subr.bf16.mxu0 0
          %570 = vmatpush1.bf16.msra.mxu0 %v546
          %571 = vmatprep.subr.bf16.mxu0 0
          %572 = vmatpush1.bf16.msra.mxu0 0
          %573 = vmatprep.subr.bf16.mxu0 0
          %574 = vmatpush1.bf16.msra.mxu0 0
          %575 = vmatprep.subr.bf16.mxu0 0
          %576 = vmatpush1.bf16.msra.mxu0 0
          %577 = vmatprep.subr.bf16.mxu0 0
          %578 = vmatpush1.bf16.msra.mxu0 0
          %579 = vmatprep.subr.bf16.mxu0 0
          %580 = vmatpush1.bf16.msra.mxu0 0
          %581 = vmatprep.subr.bf16.mxu0 0
          %582 = vmatpush1.bf16.msra.mxu0 0
          %583 = vmatprep.subr.bf16.mxu0 0
          %584 = vmatpush1.bf16.msra.mxu0 0
          %585 = vmatprep.subr.bf16.mxu0 0
          %586 = vmatpush1.bf16.msra.mxu0 0
          %587 = vmatprep.mubr.bf16.mxu0 0
          %588 = vmatmul.mubr.bf16.gmra.mrb[0].mxu0 %v483
          %v589 = vpop.f32.mrb[0].mxu0
          %v590 = vadd.f32 %v505, %v589
          %v591 = vpop.f32.mrb[0].mxu0
          %v592 = vpop.f32.mrb[0].mxu0
          %v593 = vadd.f32 %v505, %v592
          %v594 = vpop.f32.mrb[0].mxu0
          %595 = vdwg.mxu0
          %vm596 = vcmp.ge.f32.partialorder %v590, 0.0
          %vm597 = vcmp.ge.f32.partialorder %v593, 0.0
          %v598 = vmul.f32 %v590, 0.01
          %v599 = vmul.f32 %v593, 0.01
          %v600 = vsel %vm596, %v590, %v598
          %v601 = vsel %vm597, %v593, %v599
          %v602 = vpack.c.bf16 %v601, %v600
          %603 = vst [vmem:[#allocation2] sm:$0xff] %v602
        $region64: #{tpu_custom_call.1} parent=43 // pred_fallthru
          _
        %v604 = vld [vmem:[#allocation2] sm:$0xff]
        %v605 = vld [vmem:[#allocation9] sm:$0xff]
        %v606 = vld [vmem:[#allocation9 + $0x8] sm:$0xff]
        %v607 = vld [vmem:[#allocation9 + $0x10] sm:$0xff]
        %v608 = vld [vmem:[#allocation9 + $0x18] sm:$0xff]
        %v609 = vld [vmem:[#allocation9 + $0x20] sm:$0xff]
        %v610 = vld [vmem:[#allocation9 + $0x28] sm:$0xff]
        %v611 = vld [vmem:[#allocation9 + $0x30] sm:$0xff]
        %v612 = vld [vmem:[#allocation9 + $0x38] sm:$0xff]
        %v613 = vld [vmem:[#allocation9 + $0x40] sm:$0xff]
        %v614 = vld [vmem:[#allocation9 + $0x48] sm:$0xff]
        %v615 = vld [vmem:[#allocation9 + $0x50] sm:$0xff]
        %v616 = vld [vmem:[#allocation9 + $0x58] sm:$0xff]
        %v617 = vld [vmem:[#allocation9 + $0x60] sm:$0xff]
        %v618 = vld [vmem:[#allocation9 + $0x68] sm:$0xff]
        %v619 = vld [vmem:[#allocation9 + $0x70] sm:$0xff]
        %v620 = vld [vmem:[#allocation9 + $0x78] sm:$0xff]
        %v621 = vld [vmem:[%s355] sm:$0x3]
        %v623 = vlaneseq
        %v624 = vshrl.u32 %v623, 7
        %v625 = vsub.s32 0, %v624
        %v626 = vrot.slane %v621, %v625
        %v627 = vlaneseq
        %v628 = vshrl.u32 %v627, 7
        %v629 = vsub.s32 1, %v628
        %v630 = vrot.slane %v621, %v629
        %v649 = vunpack.c.l.b16 %v605
        %v650 = vunpack.c.h.b16 %v605
        %v651 = vunpack.c.l.b16 %v606
        %v652 = vunpack.c.h.b16 %v606
        %v653 = vunpack.c.l.b16 %v607
        %v654 = vunpack.c.h.b16 %v607
        %v655 = vunpack.c.l.b16 %v608
        %v656 = vunpack.c.h.b16 %v608
        %v657 = vunpack.c.l.b16 %v609
        %v658 = vunpack.c.h.b16 %v609
        %v659 = vunpack.c.l.b16 %v610
        %v660 = vunpack.c.h.b16 %v610
        %v661 = vunpack.c.l.b16 %v611
        %v662 = vunpack.c.h.b16 %v611
        %v663 = vunpack.c.l.b16 %v612
        %v664 = vunpack.c.h.b16 %v612
        %v665 = vunpack.c.l.b16 %v613
        %v666 = vunpack.c.h.b16 %v613
        %v667 = vunpack.c.l.b16 %v614
        %v668 = vunpack.c.h.b16 %v614
        %v669 = vunpack.c.l.b16 %v615
        %v670 = vunpack.c.h.b16 %v615
        %v671 = vunpack.c.l.b16 %v616
        %v672 = vunpack.c.h.b16 %v616
        %v673 = vunpack.c.l.b16 %v617
        %v674 = vunpack.c.h.b16 %v617
        %v675 = vunpack.c.l.b16 %v618
        %v676 = vunpack.c.h.b16 %v618
        %v677 = vunpack.c.l.b16 %v619
        %v678 = vunpack.c.h.b16 %v619
        %v679 = vunpack.c.l.b16 %v620
        %v680 = vunpack.c.h.b16 %v620
        %v681 = vpack.c.b16 %v651, %v649
        %v682 = vpack.c.b16 %v652, %v650
        %v683 = vpack.c.b16 %v655, %v653
        %v684 = vpack.c.b16 %v656, %v654
        %v685 = vpack.c.b16 %v659, %v657
        %v686 = vpack.c.b16 %v660, %v658
        %v687 = vpack.c.b16 %v663, %v661
        %v688 = vpack.c.b16 %v664, %v662
        %v689 = vpack.c.b16 %v667, %v665
        %v690 = vpack.c.b16 %v668, %v666
        %v691 = vpack.c.b16 %v671, %v669
        %v692 = vpack.c.b16 %v672, %v670
        %v693 = vpack.c.b16 %v675, %v673
        %v694 = vpack.c.b16 %v676, %v674
        %v695 = vpack.c.b16 %v679, %v677
        %v696 = vpack.c.b16 %v680, %v678
        %713 = vmatprep.subr.bf16.mxu0 %v682
        %714 = vmatpush1.bf16.msra.mxu0 %v681
        %715 = vmatprep.subr.bf16.mxu0 %v684
        %716 = vmatpush1.bf16.msra.mxu0 %v683
        %717 = vmatprep.subr.bf16.mxu0 %v686
        %718 = vmatpush1.bf16.msra.mxu0 %v685
        %719 = vmatprep.subr.bf16.mxu0 %v688
        %720 = vmatpush1.bf16.msra.mxu0 %v687
        %721 = vmatprep.subr.bf16.mxu0 %v690
        %722 = vmatpush1.bf16.msra.mxu0 %v689
        %723 = vmatprep.subr.bf16.mxu0 %v692
        %724 = vmatpush1.bf16.msra.mxu0 %v691
        %725 = vmatprep.subr.bf16.mxu0 %v694
        %726 = vmatpush1.bf16.msra.mxu0 %v693
        %727 = vmatprep.subr.bf16.mxu0 %v696
        %728 = vmatpush1.bf16.msra.mxu0 %v695
        %729 = vmatprep.subr.bf16.mxu0 0
        %730 = vmatpush1.bf16.msra.mxu0 0
        %731 = vmatprep.subr.bf16.mxu0 0
        %732 = vmatpush1.bf16.msra.mxu0 0
        %733 = vmatprep.subr.bf16.mxu0 0
        %734 = vmatpush1.bf16.msra.mxu0 0
        %735 = vmatprep.subr.bf16.mxu0 0
        %736 = vmatpush1.bf16.msra.mxu0 0
        %737 = vmatprep.subr.bf16.mxu0 0
        %738 = vmatpush1.bf16.msra.mxu0 0
        %739 = vmatprep.subr.bf16.mxu0 0
        %740 = vmatpush1.bf16.msra.mxu0 0
        %741 = vmatprep.subr.bf16.mxu0 0
        %742 = vmatpush1.bf16.msra.mxu0 0
        %743 = vmatprep.subr.bf16.mxu0 0
        %744 = vmatpush1.bf16.msra.mxu0 0
        %745 = vmatprep.mubr.bf16.mxu0 0
        %746 = vmatmul.mubr.bf16.gmra.mrb[0].mxu0 %v604
        %v747 = vpop.f32.mrb[0].mxu0
        %v748 = vadd.f32 %v626, %v747
        %v749 = vpop.f32.mrb[0].mxu0
        %v750 = vadd.f32 %v630, %v749
        %v751 = vpop.f32.mrb[0].mxu0
        %v752 = vadd.f32 %v626, %v751
        %v753 = vpop.f32.mrb[0].mxu0
        %v754 = vadd.f32 %v630, %v753
        %755 = vdwg.mxu0
        %v756 = vmul.f32 %v748, 0.5
        %v757 = vmul.f32 %v750, 0.5
        %v758 = vmul.f32 %v752, 0.5
        %v759 = vmul.f32 %v754, 0.5
        %v760 = vtanh.pop %v756
        %v761 = vtanh.pop %v757
        %v762 = vtanh.pop %v758
        %v763 = vtanh.pop %v759
        %v764 = vmul.f32 %v760, 0.5
        %v765 = vmul.f32 %v761, 0.5
        %v766 = vmul.f32 %v762, 0.5
        %v767 = vmul.f32 %v763, 0.5
        %v768 = vadd.f32 %v764, 0.5
        %v769 = vadd.f32 %v765, 0.5
        %v770 = vadd.f32 %v766, 0.5
        %v771 = vadd.f32 %v767, 0.5
        %v772 = vpack.c.bf16 %v770, %v768
        %v773 = vpack.c.bf16 %v771, %v769
        %v776 = vunpack.c.l.b16 %v772
        %v777 = vunpack.c.l.b16 %v773
        %v778 = vunpack.c.h.b16 %v772
        %v779 = vunpack.c.h.b16 %v773
        %v780 = vpack.c.b16 %v777, %v776
        %v781 = vpack.c.b16 %v779, %v778
        %784 = vst [vmem:[%s349] sm:$0xff] %v780
        %785 = vst [vmem:[%s349 + $0x8] sm:$0xff] %v781
        %s786 = sand.u32 %s188, 1
        %s787 = scalar_lea.sflag [#allocation5], %s786
        %s788 = sand.u32 %s188, 1
        %s789 = smul.addr %s788, 16
        %s790 = scalar_lea.vmem [#allocation11], %s789
        // Predicated region
        $region65: #{tpu_custom_call.1} parent=43 // pred_check
          %p791 = pneg %p198
        $region66: #{tpu_custom_call.1} parent=43 // pred_check_branch
          %793 = sbr.rel (%p791) target = $region68
        $region67: #{tpu_custom_call.1} parent=43 // pred_region
          %s794 = smul.u32 2, %s29
          %s795 = smul.u32 2, %s30
          %s797 = ssub.s32 256, 256
          %798 = vsyncadd %s787, %s797
          %s799 = smul.addr %s794, 2
          %s800 = sadd.s32 %s795, %s799
          %s801 = smul.addr %s800, 64
          %s802 = scalar_lea.hbm %s6, %s801
          %s803 = sshll.u32 %s790, 4
          %s804 = int_to_ptr.vmem [resolvable:$true] %s803
          %809 = dma.vmem_to_hbm [thread:$0]  %s804, 256, %s802, %s787, 128, 128, 8
        $region68: #{tpu_custom_call.1} parent=43 // pred_fallthru
          _
      $region44: #{tpu_custom_call.1} parent=5 // pred_fallthru
        _
      %p810 = scmp.le.s32.totalorder 2, %s20
      // Predicated region
      $region69: #{tpu_custom_call.1} parent=5 // pred_check
        %p811 = pneg %p810
      $region70: #{tpu_custom_call.1} parent=5 // pred_check_branch
        %813 = sbr.rel (%p811) target = $region72
      $region71: #{tpu_custom_call.1} parent=5 // pred_region
        %s814 = ssub.s32 %s20, 2
        // Predicated region
        $region73: #{tpu_custom_call.1} parent=71 // pred_check
          %p815 = pneg %p204
        $region74: #{tpu_custom_call.1} parent=71 // pred_check_branch
          %817 = sbr.rel (%p815) target = $region76
        $region75: #{tpu_custom_call.1} parent=71 // pred_region
          %s818 = sand.u32 %s189, 1
          %s819 = scalar_lea.sflag [#allocation5], %s818
          %s820 = sand.u32 %s189, 1
          %s821 = smul.addr %s820, 16
          %s822 = scalar_lea.vmem [#allocation11], %s821
          %823 = dma.done %s819, 256
        $region76: #{tpu_custom_call.1} parent=71 // pred_fallthru
          _
      $region72: #{tpu_custom_call.1} parent=5 // pred_fallthru
        _
    $region6: #{tpu_custom_call.1} parent=1 // loop_footer
      %s24 = sadd.s32 1, %s20
    $region7: #{tpu_custom_call.1} parent=1 // loop_footer_branch
      %19 = sbr.rel target = $region3
    $region8: #{tpu_custom_call.1} parent=1 // loop_exit
      _
    %824 = vsyncpa [#allocation4], 1
    %s825 = scalar_lea.sflag [#allocation4], 1
    %826 = vsyncpa %s825, 1
    %827 = vsyncpa [#allocation7], 1
    %828 = vsyncpa [#allocation10], 1
    %829 = vsyncpa [#allocation5], 1
    %s830 = scalar_lea.sflag [#allocation5], 1
    %831 = vsyncpa %s830, 1

</llo_original>
